<compile_context>
chip_gen: v5e
topology: v5e:2x2
jax: 0.10.0
libtpu: 0.0.40
codegen_flags: <defaults>
</compile_context>

<pallas_src>
import math

import jax
import jax.numpy as jnp
import numpy as np
from jax.experimental import pallas as pl
from jax.experimental.pallas import tpu as pltpu


# ----------------------------------------------------------------------------
# Pallas kernel
# ----------------------------------------------------------------------------
def _adaptive_input_kernel(rows_ref, table_ref, out_ref):
    # rows_ref:  (T, 1) int32           -- precomputed flat row index per token
    # table_ref: (n_rows, D_pad)        -- fused (emb @ W^T), band-stacked, VMEM-resident
    # out_ref:   (T, D_pad) float32
    rows = rows_ref[...]                                          # (T, 1)
    t = rows.shape[0]
    n_rows = table_ref.shape[0]

    # One-hot gather as a single MXU matmul (f32 accumulation).
    col = jax.lax.broadcasted_iota(jnp.int32, (t, n_rows), 1)     # (T, n_rows)
    onehot = (col == rows).astype(table_ref.dtype)                # exact 0/1 in bf16
    out_ref[...] = jnp.dot(onehot, table_ref[...],
                           preferred_element_type=jnp.float32)    # (T, D_pad) f32


# ----------------------------------------------------------------------------
# Wrapper
# ----------------------------------------------------------------------------
def _vmem_cap_bytes():
    # Per-core VMEM capacity; conservative fallback = v7x's 64 MiB per TensorCore.
    try:
        cap = getattr(pltpu.get_tpu_info(), "vmem_capacity_bytes", None)
        if cap:
            return int(cap)
    except Exception:
        pass
    return 64 << 20


def adaptive_input_forward(ids, fused_table, cutoffs, band_offsets, invalid_row,
                           d_out, *, tile_t=256):
    """ids: int array of any shape; returns float32 of shape ids.shape + (d_out,).

    tile_t: token tile. Sweep 128/256/512: 128 suffices for v5e's 128x128 MXU,
    256 fills the 256-wide MXU on v6e/v7x, 512 further amortizes the
    ~0.35 us/step grid overhead.
    """
    orig_shape = ids.shape
    flat = ids.reshape(-1).astype(jnp.int32)
    n = flat.shape[0]
    n_pad = -(-n // tile_t) * tile_t

    # Band -> flat-row mapping, hoisted out of the kernel (fused by XLA with the
    # pad; removes NB*(2 cmp + and + where + add) VALU ops per tile from the
    # kernel).  Out-of-range ids fall through every band and keep the invalid
    # (all-zero) row; padded tail tokens use it too.
    rows = jnp.full_like(flat, invalid_row)
    prev = 0
    for off, hi in zip(band_offsets, cutoffs):
        in_band = jnp.logical_and(flat >= prev, flat < hi)
        rows = jnp.where(in_band, flat - prev + off, rows)
        prev = hi
    rows = jnp.pad(rows, (0, n_pad - n), constant_values=invalid_row)
    rows2d = rows.reshape(n_pad, 1)

    n_rows, d_out_pad = fused_table.shape
    assert d_out_pad % 128 == 0 and n_rows % 128 == 0  # lane-dense one-hot & output

    # Footprint-derived VMEM limit (single table copy + double-buffered id/out
    # tiles + headroom), capped at ~7/8 of the per-core capacity.
    table_bytes = n_rows * d_out_pad * fused_table.dtype.itemsize   # single copy
    ids_block_bytes = tile_t * 128 * 4        # (tile_t, 1) int32, lane-padded
    out_block_bytes = tile_t * d_out_pad * 4
    vmem_need = table_bytes + 2 * (ids_block_bytes + out_block_bytes) + (2 << 20)
    vmem_limit = int(min(max(vmem_need, 16 << 20), _vmem_cap_bytes() * 7 // 8))

    grid = (n_pad // tile_t,)
    flops = 2 * n_pad * n_rows * d_out_pad
    # Table is fetched once per TensorCore (x2 of this under v7x megacore).
    bytes_accessed = n_pad * 4 + table_bytes + n_pad * d_out_pad * 4

    out = pl.pallas_call(
        _adaptive_input_kernel,
        out_shape=jax.ShapeDtypeStruct((n_pad, d_out_pad), jnp.float32),
        grid_spec=pltpu.PrefetchScalarGridSpec(
            num_scalar_prefetch=0,
            grid=grid,
            in_specs=[
                pl.BlockSpec((tile_t, 1), lambda t: (t, 0)),
                # Whole fused table as ONE VMEM-resident copy: unblocked, so it
                # is not part of the pipeline and is not double-buffered.
                pl.BlockSpec(memory_space=pltpu.MemorySpace.VMEM),
            ],
            out_specs=pl.BlockSpec((tile_t, d_out_pad), lambda t: (t, 0)),
        ),
        compiler_params=pltpu.CompilerParams(
            dimension_semantics=("parallel",),   # shards token tiles across v7x's 2 TCs
            vmem_limit_bytes=vmem_limit,
        ),
        cost_estimate=pl.CostEstimate(
            flops=flops, transcendentals=0, bytes_accessed=bytes_accessed),
    )(rows2d, fused_table)

    return out[:n, :d_out].reshape(orig_shape + (d_out,))


# ----------------------------------------------------------------------------
# Deterministic parameter construction (matches module __init__ shapes / init)
# ----------------------------------------------------------------------------
def build_params(key, vocab_size, padding_idx, initial_dim, factor, output_dim, cutoff):
    if vocab_size > cutoff[-1]:
        cutoff = cutoff + [vocab_size]
    else:
        assert vocab_size == cutoff[-1]

    emb_tables, lin_weights = [], []
    prev = 0
    for i, hi in enumerate(cutoff):
        size = hi - prev
        dim = int(initial_dim // factor ** i)
        key, k_e, k_w = jax.random.split(key, 3)
        # nn.init.normal_(weight, mean=0, std=dim**-0.5); row padding_idx zeroed
        # (init_weights zeroes that row in every band's embedding).
        emb = jax.random.normal(k_e, (size, dim), jnp.float32) * (dim ** -0.5)
        if padding_idx < size:
            emb = emb.at[padding_idx].set(0.0)
        # nn.init.xavier_uniform_ on Linear weight of shape (output_dim, dim)
        limit = math.sqrt(6.0 / (dim + output_dim))
        w = jax.random.uniform(k_w, (output_dim, dim), jnp.float32, -limit, limit)
        emb_tables.append(emb)
        lin_weights.append(w)
        prev = hi
    return cutoff, emb_tables, lin_weights


def build_fused_table(emb_tables, lin_weights, output_dim, *, dtype=jnp.bfloat16):
    """fused[i] = emb_i @ W_i^T, bands stacked back-to-back.

    Each band is padded only to the dtype's sublane multiple (16 for bf16,
    8 for f32).  One extra all-zero 'invalid' row is reserved for out-of-range
    and padding tokens, and the total height is rounded up to a multiple of 128
    so the in-kernel one-hot stays lane-dense.
    Returns (table, band_offsets, invalid_row).
    """
    itemsize = jnp.dtype(dtype).itemsize
    sublane = 8 * (4 // itemsize)          # 8 for f32, 16 for bf16
    offsets, off = [], 0
    for e in emb_tables:
        offsets.append(off)
        off += -(-e.shape[0] // sublane) * sublane
    invalid_row = off                      # guaranteed zero row
    n_rows = -(-(off + 1) // 128) * 128
    d_out_pad = -(-output_dim // 128) * 128

    fused = np.zeros((n_rows, d_out_pad), np.float32)
    for o, e, w in zip(offsets, emb_tables, lin_weights):
        blk = np.asarray(e, np.float32) @ np.asarray(w, np.float32).T  # (s, output_dim)
        fused[o:o + e.shape[0], :output_dim] = blk
    return jnp.asarray(fused, dtype), tuple(offsets), invalid_row


# ----------------------------------------------------------------------------
# Pure-JAX reference for verification (module semantics, f32)
# ----------------------------------------------------------------------------
def reference_forward(ids, emb_tables, lin_weights, cutoffs, d_out):
    flat = ids.reshape(-1).astype(jnp.int32)
    out = jnp.zeros((flat.shape[0], d_out), jnp.float32)
    prev = 0
    for i, hi in enumerate(cutoffs):
        mask = (flat >= prev) & (flat < hi)
        local = jnp.clip(flat - prev, 0, emb_tables[i].shape[0] - 1)
        emb = emb_tables[i][local]
        proj = emb @ lin_weights[i].T
        out = out + jnp.where(mask[:, None], proj, 0.0)
        prev = hi
    return out.reshape(ids.shape + (d_out,))


# ----------------------------------------------------------------------------
if __name__ == "__main__":
    # Module hyperparameters (small, consistent with the forward semantics).
    vocab_size = 48
    padding_idx = 1
    initial_dim = 32
    factor = 2.0
    output_dim = 32
    cutoff = [16, 32]          # becomes [16, 32, 48]

    key = jax.random.PRNGKey(0)
    key, k_params, k_ids = jax.random.split(key, 3)

    cutoffs, emb_tables, lin_weights = build_params(
        k_params, vocab_size, padding_idx, initial_dim, factor, output_dim, cutoff
    )
    fused_table, band_offsets, invalid_row = build_fused_table(
        emb_tables, lin_weights, output_dim, dtype=jnp.bfloat16
    )

    # Input token ids, shape (batch=2, seq=8); include padding_idx tokens.
    ids = jax.random.randint(k_ids, (2, 8), 0, vocab_size, dtype=jnp.int32)
    ids = ids.at[0, 0].set(padding_idx)

    out = adaptive_input_forward(ids, fused_table, cutoffs, band_offsets,
                                 invalid_row, output_dim)
    out = jax.block_until_ready(out)
    assert out.shape == ids.shape + (output_dim,)
    assert out.dtype == jnp.float32

    # --- Check 1: exact gather mechanics against the quantized fused table. ---
    # The one-hot matmul must reproduce the selected bf16 table row exactly
    # (1.0 * x products are exact, other products are exactly zero).
    flat_ids = np.asarray(ids).reshape(-1)
    rows = np.full_like(flat_ids, invalid_row)
    prev = 0
    for off, hi in zip(band_offsets, cutoffs):
        m = (flat_ids >= prev) & (flat_ids < hi)
        rows = np.where(m, flat_ids - prev + off, rows)
        prev = hi
    gather_ref = np.asarray(fused_table.astype(jnp.float32))[rows][:, :output_dim]
    gather_ref = gather_ref.reshape(ids.shape + (output_dim,))
    np.testing.assert_allclose(np.asarray(out), gather_ref, rtol=1e-6, atol=1e-6)

    # --- Check 2: module semantics against the pure-f32 reference. ---
    # Tolerance accounts for the bf16 quantization of the fused table.
    ref = reference_forward(ids, emb_tables, lin_weights, cutoffs, output_dim)
    np.testing.assert_allclose(np.asarray(out), np.asarray(ref), rtol=2e-2, atol=1e-2)

    print("KERNEL_OK")
</pallas_src>

<mosaic_0001>
module attributes {stable_mosaic.version = 11 : i64} {
  func.func @_adaptive_input_kernel(%arg0: i32, %arg1: memref<256x1xi32, #tpu.memory_space<vmem>>, %arg2: memref<128x128xbf16, #tpu.memory_space<vmem>>, %arg3: memref<256x128xf32, #tpu.memory_space<vmem>>) attributes {dimension_semantics = [#tpu.dimension_semantics<parallel>], iteration_bounds = array<i64: 1>, scalar_prefetch = 0 : i64, scratch_operands = 0 : i64, tpu.core_type = #tpu.core_type<tc>, window_params = [{transform_indices = @transform_0, window_bounds = array<i64: 256, 1>}, {pipeline_mode = #tpu.pipeline_mode<synchronous>, transform_indices = @transform_1, window_bounds = array<i64: 128, 128>}, {transform_indices = @transform_2, window_bounds = array<i64: 256, 128>}]} {
    %c0 = arith.constant 0 : index
    %c0_0 = arith.constant 0 : index
    %0 = vector.load %arg1[%c0, %c0_0] : memref<256x1xi32, #tpu.memory_space<vmem>>, vector<256x1xi32>
    %1 = tpu.iota {dimensions = array<i32: 1>} : vector<256x128xi32>
    %2 = vector.broadcast %0 : vector<256x1xi32> to vector<256x128xi32>
    %3 = arith.cmpi eq, %1, %2 : vector<256x128xi32>
    %4 = arith.extui %3 : vector<256x128xi1> to vector<256x128xi32>
    %5 = arith.sitofp %4 : vector<256x128xi32> to vector<256x128xf32>
    %6 = arith.truncf %5 : vector<256x128xf32> to vector<256x128xbf16>
    %c0_1 = arith.constant 0 : index
    %c0_2 = arith.constant 0 : index
    %7 = vector.load %arg2[%c0_1, %c0_2] : memref<128x128xbf16, #tpu.memory_space<vmem>>, vector<128x128xbf16>
    %cst = arith.constant dense<0.000000e+00> : vector<256x128xf32>
    %8 = tpu.matmul %6, %7, %cst {dimension_numbers = #tpu.dot_dimension_numbers<[1], [0], [0], [1], [0, 0, 1, 1], [], []>} : vector<256x128xbf16>, vector<128x128xbf16>, vector<256x128xf32> -> vector<256x128xf32>
    %c0_3 = arith.constant 0 : index
    %c0_4 = arith.constant 0 : index
    %9 = vector.load %arg3[%c0_3, %c0_4] : memref<256x128xf32, #tpu.memory_space<vmem>>, vector<256x128xf32>
    tpu.vector_store %arg3[%c0_3, %c0_4], %8 {strides = array<i32>} : memref<256x128xf32, #tpu.memory_space<vmem>>, vector<256x128xf32>,
    return
  }
  func.func @transform_0(%arg0: i32) -> (i32, i32) {
    %c0_i32 = arith.constant 0 : i32
    %c0_i32_0 = arith.constant 0 : i32
    return %arg0, %c0_i32 : i32, i32
  }
  func.func @transform_1(%arg0: i32) -> (i32, i32) {
    %c0_i32 = arith.constant 0 : i32
    %c0_i32_0 = arith.constant 0 : i32
    %c0_i32_1 = arith.constant 0 : i32
    return %c0_i32, %c0_i32_0 : i32, i32
  }
  func.func @transform_2(%arg0: i32) -> (i32, i32) {
    %c0_i32 = arith.constant 0 : i32
    %c0_i32_0 = arith.constant 0 : i32
    return %arg0, %c0_i32 : i32, i32
  }
}

</mosaic_0001>

<llo_original>
// kernel: tpu_custom_call.1
$region0: #{tpu_custom_call.1}
  #allocation0 [shape = 'u32[]', space=smem, size = 0x4, offset = 0x4, fixed_abs, tag = 'smem constant byte address 0x4 - core index']
  #allocation1 [shape = 'u32[72,128]{1,0:T(1,128)}', space=vmem, size = 0x9000, scoped, tag = 'internal scratch']
  %s0 = inlined_call_operand.vmem [shape: s32[256,1], index: 0, kind: input, shape index: {}]
  %s1 = inlined_call_operand.vmem [shape: bf16[128,128], index: 1, kind: input, shape index: {}]
  %s2 = inlined_call_operand.hbm [shape: f32[256,128], index: 2, kind: output, shape index: {}]
  %s3 = sld [smem:[#allocation0]]
  $region18: #{tpu_custom_call.1} parent=0
    _
  %s5 = ssub.s32 1, %s3
  %s6 = scalar_select 0, %s5, %s3
  $region1: #{tpu_custom_call.1} parent=0
    #allocation2 [shape = 'u8[131072]{0}', space=vmem, size = 0x20000, scoped, tag = 'output window, operand 0, single buffered']
    #allocation3 [shape = 's32[1]{0}', space=sflag, size = 0x4, scoped, tag = 'scoped memory for tpu_custom_call.1']
    %7 = vsyncpa [#allocation3], 0
    // Predicated region
    $region2: #{tpu_custom_call.1} parent=1 // pred_check
      _
    $region3: #{tpu_custom_call.1} parent=1 // pred_check_branch
      %9 = sbr.rel (0) target = $region5
    $region4: #{tpu_custom_call.1} parent=1 // pred_region
      _
    $region5: #{tpu_custom_call.1} parent=1 // pred_fallthru
      _
    // Predicated region
    $region6: #{tpu_custom_call.1} parent=1 // pred_check
      _
    $region7: #{tpu_custom_call.1} parent=1 // pred_check_branch
      %11 = sbr.rel (0) target = $region9
    $region8: #{tpu_custom_call.1} parent=1 // pred_region
      _
    $region9: #{tpu_custom_call.1} parent=1 // pred_fallthru
      _
    %v12 = vld [vmem:[%s0] sm:$0xff]
    %v13 = vld [vmem:[%s0 + $0x8] sm:$0xff]
    %v14 = vld [vmem:[%s0 + $0x10] sm:$0xff]
    %v15 = vld [vmem:[%s0 + $0x18] sm:$0xff]
    %v16 = vld [vmem:[%s0 + $0x20] sm:$0xff]
    %v17 = vld [vmem:[%s0 + $0x28] sm:$0xff]
    %v18 = vld [vmem:[%s0 + $0x30] sm:$0xff]
    %v19 = vld [vmem:[%s0 + $0x38] sm:$0xff]
    %v20 = vld [vmem:[%s0 + $0x40] sm:$0xff]
    %v21 = vld [vmem:[%s0 + $0x48] sm:$0xff]
    %v22 = vld [vmem:[%s0 + $0x50] sm:$0xff]
    %v23 = vld [vmem:[%s0 + $0x58] sm:$0xff]
    %v24 = vld [vmem:[%s0 + $0x60] sm:$0xff]
    %v25 = vld [vmem:[%s0 + $0x68] sm:$0xff]
    %v26 = vld [vmem:[%s0 + $0x70] sm:$0xff]
    %v27 = vld [vmem:[%s0 + $0x78] sm:$0xff]
    %v28 = vld [vmem:[%s0 + $0x80] sm:$0xff]
    %v29 = vld [vmem:[%s0 + $0x88] sm:$0xff]
    %v30 = vld [vmem:[%s0 + $0x90] sm:$0xff]
    %v31 = vld [vmem:[%s0 + $0x98] sm:$0xff]
    %v32 = vld [vmem:[%s0 + $0xa0] sm:$0xff]
    %v33 = vld [vmem:[%s0 + $0xa8] sm:$0xff]
    %v34 = vld [vmem:[%s0 + $0xb0] sm:$0xff]
    %v35 = vld [vmem:[%s0 + $0xb8] sm:$0xff]
    %v36 = vld [vmem:[%s0 + $0xc0] sm:$0xff]
    %v37 = vld [vmem:[%s0 + $0xc8] sm:$0xff]
    %v38 = vld [vmem:[%s0 + $0xd0] sm:$0xff]
    %v39 = vld [vmem:[%s0 + $0xd8] sm:$0xff]
    %v40 = vld [vmem:[%s0 + $0xe0] sm:$0xff]
    %v41 = vld [vmem:[%s0 + $0xe8] sm:$0xff]
    %v42 = vld [vmem:[%s0 + $0xf0] sm:$0xff]
    %v43 = vld [vmem:[%s0 + $0xf8] sm:$0xff]
    %v44 = vlaneseq
    %v45 = vand.u32 %v44, 127
    %46 = vset.pattern.permute.xlu0 0
    %47 = vperm.xlu0 %46, %v12
    %v48 = vpop.permute.xlu0 %47
    %49 = vset.pattern.permute.xlu0 0
    %50 = vperm.xlu0 %49, %v13
    %v51 = vpop.permute.xlu0 %50
    %52 = vset.pattern.permute.xlu0 0
    %53 = vperm.xlu0 %52, %v14
    %v54 = vpop.permute.xlu0 %53
    %55 = vset.pattern.permute.xlu0 0
    %56 = vperm.xlu0 %55, %v15
    %v57 = vpop.permute.xlu0 %56
    %58 = vset.pattern.permute.xlu0 0
    %59 = vperm.xlu0 %58, %v16
    %v60 = vpop.permute.xlu0 %59
    %61 = vset.pattern.permute.xlu0 0
    %62 = vperm.xlu0 %61, %v17
    %v63 = vpop.permute.xlu0 %62
    %64 = vset.pattern.permute.xlu0 0
    %65 = vperm.xlu0 %64, %v18
    %v66 = vpop.permute.xlu0 %65
    %67 = vset.pattern.permute.xlu0 0
    %68 = vperm.xlu0 %67, %v19
    %v69 = vpop.permute.xlu0 %68
    %70 = vset.pattern.permute.xlu0 0
    %71 = vperm.xlu0 %70, %v20
    %v72 = vpop.permute.xlu0 %71
    %73 = vset.pattern.permute.xlu0 0
    %74 = vperm.xlu0 %73, %v21
    %v75 = vpop.permute.xlu0 %74
    %76 = vset.pattern.permute.xlu0 0
    %77 = vperm.xlu0 %76, %v22
    %v78 = vpop.permute.xlu0 %77
    %79 = vset.pattern.permute.xlu0 0
    %80 = vperm.xlu0 %79, %v23
    %v81 = vpop.permute.xlu0 %80
    %82 = vset.pattern.permute.xlu0 0
    %83 = vperm.xlu0 %82, %v24
    %v84 = vpop.permute.xlu0 %83
    %85 = vset.pattern.permute.xlu0 0
    %86 = vperm.xlu0 %85, %v25
    %v87 = vpop.permute.xlu0 %86
    %88 = vset.pattern.permute.xlu0 0
    %89 = vperm.xlu0 %88, %v26
    %v90 = vpop.permute.xlu0 %89
    %91 = vset.pattern.permute.xlu0 0
    %92 = vperm.xlu0 %91, %v27
    %v93 = vpop.permute.xlu0 %92
    %94 = vset.pattern.permute.xlu0 0
    %95 = vperm.xlu0 %94, %v28
    %v96 = vpop.permute.xlu0 %95
    %97 = vset.pattern.permute.xlu0 0
    %98 = vperm.xlu0 %97, %v29
    %v99 = vpop.permute.xlu0 %98
    %100 = vset.pattern.permute.xlu0 0
    %101 = vperm.xlu0 %100, %v30
    %v102 = vpop.permute.xlu0 %101
    %103 = vset.pattern.permute.xlu0 0
    %104 = vperm.xlu0 %103, %v31
    %v105 = vpop.permute.xlu0 %104
    %106 = vset.pattern.permute.xlu0 0
    %107 = vperm.xlu0 %106, %v32
    %v108 = vpop.permute.xlu0 %107
    %109 = vset.pattern.permute.xlu0 0
    %110 = vperm.xlu0 %109, %v33
    %v111 = vpop.permute.xlu0 %110
    %112 = vset.pattern.permute.xlu0 0
    %113 = vperm.xlu0 %112, %v34
    %v114 = vpop.permute.xlu0 %113
    %115 = vset.pattern.permute.xlu0 0
    %116 = vperm.xlu0 %115, %v35
    %v117 = vpop.permute.xlu0 %116
    %118 = vset.pattern.permute.xlu0 0
    %119 = vperm.xlu0 %118, %v36
    %v120 = vpop.permute.xlu0 %119
    %121 = vset.pattern.permute.xlu0 0
    %122 = vperm.xlu0 %121, %v37
    %v123 = vpop.permute.xlu0 %122
    %124 = vset.pattern.permute.xlu0 0
    %125 = vperm.xlu0 %124, %v38
    %v126 = vpop.permute.xlu0 %125
    %127 = vset.pattern.permute.xlu0 0
    %128 = vperm.xlu0 %127, %v39
    %v129 = vpop.permute.xlu0 %128
    %130 = vset.pattern.permute.xlu0 0
    %131 = vperm.xlu0 %130, %v40
    %v132 = vpop.permute.xlu0 %131
    %133 = vset.pattern.permute.xlu0 0
    %134 = vperm.xlu0 %133, %v41
    %v135 = vpop.permute.xlu0 %134
    %136 = vset.pattern.permute.xlu0 0
    %137 = vperm.xlu0 %136, %v42
    %v138 = vpop.permute.xlu0 %137
    %139 = vset.pattern.permute.xlu0 0
    %140 = vperm.xlu0 %139, %v43
    %v141 = vpop.permute.xlu0 %140
    %vm142 = vcmp.eq.s32.totalorder %v45, %v48
    %vm143 = vcmp.eq.s32.totalorder %v45, %v51
    %vm144 = vcmp.eq.s32.totalorder %v45, %v54
    %vm145 = vcmp.eq.s32.totalorder %v45, %v57
    %vm146 = vcmp.eq.s32.totalorder %v45, %v60
    %vm147 = vcmp.eq.s32.totalorder %v45, %v63
    %vm148 = vcmp.eq.s32.totalorder %v45, %v66
    %vm149 = vcmp.eq.s32.totalorder %v45, %v69
    %vm150 = vcmp.eq.s32.totalorder %v45, %v72
    %vm151 = vcmp.eq.s32.totalorder %v45, %v75
    %vm152 = vcmp.eq.s32.totalorder %v45, %v78
    %vm153 = vcmp.eq.s32.totalorder %v45, %v81
    %vm154 = vcmp.eq.s32.totalorder %v45, %v84
    %vm155 = vcmp.eq.s32.totalorder %v45, %v87
    %vm156 = vcmp.eq.s32.totalorder %v45, %v90
    %vm157 = vcmp.eq.s32.totalorder %v45, %v93
    %vm158 = vcmp.eq.s32.totalorder %v45, %v96
    %vm159 = vcmp.eq.s32.totalorder %v45, %v99
    %vm160 = vcmp.eq.s32.totalorder %v45, %v102
    %vm161 = vcmp.eq.s32.totalorder %v45, %v105
    %vm162 = vcmp.eq.s32.totalorder %v45, %v108
    %vm163 = vcmp.eq.s32.totalorder %v45, %v111
    %vm164 = vcmp.eq.s32.totalorder %v45, %v114
    %vm165 = vcmp.eq.s32.totalorder %v45, %v117
    %vm166 = vcmp.eq.s32.totalorder %v45, %v120
    %vm167 = vcmp.eq.s32.totalorder %v45, %v123
    %vm168 = vcmp.eq.s32.totalorder %v45, %v126
    %vm169 = vcmp.eq.s32.totalorder %v45, %v129
    %vm170 = vcmp.eq.s32.totalorder %v45, %v132
    %vm171 = vcmp.eq.s32.totalorder %v45, %v135
    %vm172 = vcmp.eq.s32.totalorder %v45, %v138
    %vm173 = vcmp.eq.s32.totalorder %v45, %v141
    %v174 = vsel %vm142, 1, 0
    %v175 = vsel %vm143, 1, 0
    %v176 = vsel %vm144, 1, 0
    %v177 = vsel %vm145, 1, 0
    %v178 = vsel %vm146, 1, 0
    %v179 = vsel %vm147, 1, 0
    %v180 = vsel %vm148, 1, 0
    %v181 = vsel %vm149, 1, 0
    %v182 = vsel %vm150, 1, 0
    %v183 = vsel %vm151, 1, 0
    %v184 = vsel %vm152, 1, 0
    %v185 = vsel %vm153, 1, 0
    %v186 = vsel %vm154, 1, 0
    %v187 = vsel %vm155, 1, 0
    %v188 = vsel %vm156, 1, 0
    %v189 = vsel %vm157, 1, 0
    %v190 = vsel %vm158, 1, 0
    %v191 = vsel %vm159, 1, 0
    %v192 = vsel %vm160, 1, 0
    %v193 = vsel %vm161, 1, 0
    %v194 = vsel %vm162, 1, 0
    %v195 = vsel %vm163, 1, 0
    %v196 = vsel %vm164, 1, 0
    %v197 = vsel %vm165, 1, 0
    %v198 = vsel %vm166, 1, 0
    %v199 = vsel %vm167, 1, 0
    %v200 = vsel %vm168, 1, 0
    %v201 = vsel %vm169, 1, 0
    %v202 = vsel %vm170, 1, 0
    %v203 = vsel %vm171, 1, 0
    %v204 = vsel %vm172, 1, 0
    %v205 = vsel %vm173, 1, 0
    %v206 = vcvt.s32.f32 %v174
    %v207 = vcvt.s32.f32 %v175
    %v208 = vcvt.s32.f32 %v176
    %v209 = vcvt.s32.f32 %v177
    %v210 = vcvt.s32.f32 %v178
    %v211 = vcvt.s32.f32 %v179
    %v212 = vcvt.s32.f32 %v180
    %v213 = vcvt.s32.f32 %v181
    %v214 = vcvt.s32.f32 %v182
    %v215 = vcvt.s32.f32 %v183
    %v216 = vcvt.s32.f32 %v184
    %v217 = vcvt.s32.f32 %v185
    %v218 = vcvt.s32.f32 %v186
    %v219 = vcvt.s32.f32 %v187
    %v220 = vcvt.s32.f32 %v188
    %v221 = vcvt.s32.f32 %v189
    %v222 = vcvt.s32.f32 %v190
    %v223 = vcvt.s32.f32 %v191
    %v224 = vcvt.s32.f32 %v192
    %v225 = vcvt.s32.f32 %v193
    %v226 = vcvt.s32.f32 %v194
    %v227 = vcvt.s32.f32 %v195
    %v228 = vcvt.s32.f32 %v196
    %v229 = vcvt.s32.f32 %v197
    %v230 = vcvt.s32.f32 %v198
    %v231 = vcvt.s32.f32 %v199
    %v232 = vcvt.s32.f32 %v200
    %v233 = vcvt.s32.f32 %v201
    %v234 = vcvt.s32.f32 %v202
    %v235 = vcvt.s32.f32 %v203
    %v236 = vcvt.s32.f32 %v204
    %v237 = vcvt.s32.f32 %v205
    %v238 = vpack.c.bf16 %v207, %v206
    %v239 = vpack.c.bf16 %v209, %v208
    %v240 = vpack.c.bf16 %v211, %v210
    %v241 = vpack.c.bf16 %v213, %v212
    %v242 = vpack.c.bf16 %v215, %v214
    %v243 = vpack.c.bf16 %v217, %v216
    %v244 = vpack.c.bf16 %v219, %v218
    %v245 = vpack.c.bf16 %v221, %v220
    %v246 = vpack.c.bf16 %v223, %v222
    %v247 = vpack.c.bf16 %v225, %v224
    %v248 = vpack.c.bf16 %v227, %v226
    %v249 = vpack.c.bf16 %v229, %v228
    %v250 = vpack.c.bf16 %v231, %v230
    %v251 = vpack.c.bf16 %v233, %v232
    %v252 = vpack.c.bf16 %v235, %v234
    %v253 = vpack.c.bf16 %v237, %v236
    %v254 = vld [vmem:[%s1] sm:$0xf]
    %v255 = vld [vmem:[%s1 + $0x4] sm:$0xf]
    %v256 = vld [vmem:[%s1 + $0x8] sm:$0xf]
    %v257 = vld [vmem:[%s1 + $0xc] sm:$0xf]
    %v258 = vld [vmem:[%s1 + $0x10] sm:$0xf]
    %v259 = vld [vmem:[%s1 + $0x14] sm:$0xf]
    %v260 = vld [vmem:[%s1 + $0x18] sm:$0xf]
    %v261 = vld [vmem:[%s1 + $0x1c] sm:$0xf]
    %v262 = vld [vmem:[%s1 + $0x20] sm:$0xf]
    %v263 = vld [vmem:[%s1 + $0x24] sm:$0xf]
    %v264 = vld [vmem:[%s1 + $0x28] sm:$0xf]
    %v265 = vld [vmem:[%s1 + $0x2c] sm:$0xf]
    %v266 = vld [vmem:[%s1 + $0x30] sm:$0xf]
    %v267 = vld [vmem:[%s1 + $0x34] sm:$0xf]
    %v268 = vld [vmem:[%s1 + $0x38] sm:$0xf]
    %v269 = vld [vmem:[%s1 + $0x3c] sm:$0xf]
    %v286 = vunpack.c.l.b16 %v254
    %v287 = vunpack.c.l.b16 %v255
    %v288 = vunpack.c.l.b16 %v256
    %v289 = vunpack.c.l.b16 %v257
    %v290 = vunpack.c.l.b16 %v258
    %v291 = vunpack.c.l.b16 %v259
    %v292 = vunpack.c.l.b16 %v260
    %v293 = vunpack.c.l.b16 %v261
    %v294 = vunpack.c.l.b16 %v262
    %v295 = vunpack.c.l.b16 %v263
    %v296 = vunpack.c.l.b16 %v264
    %v297 = vunpack.c.l.b16 %v265
    %v298 = vunpack.c.l.b16 %v266
    %v299 = vunpack.c.l.b16 %v267
    %v300 = vunpack.c.l.b16 %v268
    %v301 = vunpack.c.l.b16 %v269
    %v302 = vpack.c.b16 %v287, %v286
    %v303 = vpack.c.b16 %v289, %v288
    %v304 = vpack.c.b16 %v291, %v290
    %v305 = vpack.c.b16 %v293, %v292
    %v306 = vpack.c.b16 %v295, %v294
    %v307 = vpack.c.b16 %v297, %v296
    %v308 = vpack.c.b16 %v299, %v298
    %v309 = vpack.c.b16 %v301, %v300
    %318 = vmatpush.bf16.msra.mxu0 %v309
    %319 = vmatpush.bf16.msra.mxu0 %v308
    %320 = vmatpush.bf16.msra.mxu0 %v307
    %321 = vmatpush.bf16.msra.mxu0 %v306
    %322 = vmatpush.bf16.msra.mxu0 %v305
    %323 = vmatpush.bf16.msra.mxu0 %v304
    %324 = vmatpush.bf16.msra.mxu0 %v303
    %325 = vmatpush.bf16.msra.mxu0 %v302
    %326 = vmatmul.bf16.gmra.mxu0 %v238
    %v327 = vpop.f32.mrf.mxu0
    %v328 = vadd.f32 0.0, %v327
    %v329 = vpop.f32.mrf.mxu0
    %v330 = vadd.f32 0.0, %v329
    %331 = vmatmul.bf16.gmra.mxu0 %v239
    %v332 = vpop.f32.mrf.mxu0
    %v333 = vadd.f32 0.0, %v332
    %v334 = vpop.f32.mrf.mxu0
    %v335 = vadd.f32 0.0, %v334
    %336 = vmatmul.bf16.gmra.mxu0 %v240
    %v337 = vpop.f32.mrf.mxu0
    %v338 = vadd.f32 0.0, %v337
    %v339 = vpop.f32.mrf.mxu0
    %v340 = vadd.f32 0.0, %v339
    %341 = vmatmul.bf16.gmra.mxu0 %v241
    %v342 = vpop.f32.mrf.mxu0
    %v343 = vadd.f32 0.0, %v342
    %v344 = vpop.f32.mrf.mxu0
    %v345 = vadd.f32 0.0, %v344
    %346 = vmatmul.bf16.gmra.mxu0 %v242
    %v347 = vpop.f32.mrf.mxu0
    %v348 = vadd.f32 0.0, %v347
    %v349 = vpop.f32.mrf.mxu0
    %v350 = vadd.f32 0.0, %v349
    %351 = vmatmul.bf16.gmra.mxu0 %v243
    %v352 = vpop.f32.mrf.mxu0
    %v353 = vadd.f32 0.0, %v352
    %v354 = vpop.f32.mrf.mxu0
    %v355 = vadd.f32 0.0, %v354
    %356 = vmatmul.bf16.gmra.mxu0 %v244
    %v357 = vpop.f32.mrf.mxu0
    %v358 = vadd.f32 0.0, %v357
    %v359 = vpop.f32.mrf.mxu0
    %v360 = vadd.f32 0.0, %v359
    %361 = vmatmul.bf16.gmra.mxu0 %v245
    %v362 = vpop.f32.mrf.mxu0
    %v363 = vadd.f32 0.0, %v362
    %v364 = vpop.f32.mrf.mxu0
    %v365 = vadd.f32 0.0, %v364
    %366 = vmatmul.bf16.gmra.mxu0 %v246
    %v367 = vpop.f32.mrf.mxu0
    %v368 = vadd.f32 0.0, %v367
    %v369 = vpop.f32.mrf.mxu0
    %v370 = vadd.f32 0.0, %v369
    %371 = vmatmul.bf16.gmra.mxu0 %v247
    %v372 = vpop.f32.mrf.mxu0
    %v373 = vadd.f32 0.0, %v372
    %v374 = vpop.f32.mrf.mxu0
    %v375 = vadd.f32 0.0, %v374
    %376 = vmatmul.bf16.gmra.mxu0 %v248
    %v377 = vpop.f32.mrf.mxu0
    %v378 = vadd.f32 0.0, %v377
    %v379 = vpop.f32.mrf.mxu0
    %v380 = vadd.f32 0.0, %v379
    %381 = vmatmul.bf16.gmra.mxu0 %v249
    %v382 = vpop.f32.mrf.mxu0
    %v383 = vadd.f32 0.0, %v382
    %v384 = vpop.f32.mrf.mxu0
    %v385 = vadd.f32 0.0, %v384
    %386 = vmatmul.bf16.gmra.mxu0 %v250
    %v387 = vpop.f32.mrf.mxu0
    %v388 = vadd.f32 0.0, %v387
    %v389 = vpop.f32.mrf.mxu0
    %v390 = vadd.f32 0.0, %v389
    %391 = vmatmul.bf16.gmra.mxu0 %v251
    %v392 = vpop.f32.mrf.mxu0
    %v393 = vadd.f32 0.0, %v392
    %v394 = vpop.f32.mrf.mxu0
    %v395 = vadd.f32 0.0, %v394
    %396 = vmatmul.bf16.gmra.mxu0 %v252
    %v397 = vpop.f32.mrf.mxu0
    %v398 = vadd.f32 0.0, %v397
    %v399 = vpop.f32.mrf.mxu0
    %v400 = vadd.f32 0.0, %v399
    %401 = vmatmul.bf16.gmra.mxu0 %v253
    %v402 = vpop.f32.mrf.mxu0
    %v403 = vadd.f32 0.0, %v402
    %v404 = vpop.f32.mrf.mxu0
    %v405 = vadd.f32 0.0, %v404
    %406 = vdwg.mxu0
    %407 = vst [vmem:[#allocation2] sm:$0xff] %v328
    %408 = vst [vmem:[#allocation2 + $0x8] sm:$0xff] %v330
    %409 = vst [vmem:[#allocation2 + $0x10] sm:$0xff] %v333
    %410 = vst [vmem:[#allocation2 + $0x18] sm:$0xff] %v335
    %411 = vst [vmem:[#allocation2 + $0x20] sm:$0xff] %v338
    %412 = vst [vmem:[#allocation2 + $0x28] sm:$0xff] %v340
    %413 = vst [vmem:[#allocation2 + $0x30] sm:$0xff] %v343
    %414 = vst [vmem:[#allocation2 + $0x38] sm:$0xff] %v345
    %415 = vst [vmem:[#allocation2 + $0x40] sm:$0xff] %v348
    %416 = vst [vmem:[#allocation2 + $0x48] sm:$0xff] %v350
    %417 = vst [vmem:[#allocation2 + $0x50] sm:$0xff] %v353
    %418 = vst [vmem:[#allocation2 + $0x58] sm:$0xff] %v355
    %419 = vst [vmem:[#allocation2 + $0x60] sm:$0xff] %v358
    %420 = vst [vmem:[#allocation2 + $0x68] sm:$0xff] %v360
    %421 = vst [vmem:[#allocation2 + $0x70] sm:$0xff] %v363
    %422 = vst [vmem:[#allocation2 + $0x78] sm:$0xff] %v365
    %423 = vst [vmem:[#allocation2 + $0x80] sm:$0xff] %v368
    %424 = vst [vmem:[#allocation2 + $0x88] sm:$0xff] %v370
    %425 = vst [vmem:[#allocation2 + $0x90] sm:$0xff] %v373
    %426 = vst [vmem:[#allocation2 + $0x98] sm:$0xff] %v375
    %427 = vst [vmem:[#allocation2 + $0xa0] sm:$0xff] %v378
    %428 = vst [vmem:[#allocation2 + $0xa8] sm:$0xff] %v380
    %429 = vst [vmem:[#allocation2 + $0xb0] sm:$0xff] %v383
    %430 = vst [vmem:[#allocation2 + $0xb8] sm:$0xff] %v385
    %431 = vst [vmem:[#allocation2 + $0xc0] sm:$0xff] %v388
    %432 = vst [vmem:[#allocation2 + $0xc8] sm:$0xff] %v390
    %433 = vst [vmem:[#allocation2 + $0xd0] sm:$0xff] %v393
    %434 = vst [vmem:[#allocation2 + $0xd8] sm:$0xff] %v395
    %435 = vst [vmem:[#allocation2 + $0xe0] sm:$0xff] %v398
    %436 = vst [vmem:[#allocation2 + $0xe8] sm:$0xff] %v400
    %437 = vst [vmem:[#allocation2 + $0xf0] sm:$0xff] %v403
    %438 = vst [vmem:[#allocation2 + $0xf8] sm:$0xff] %v405
    // Predicated region
    $region10: #{tpu_custom_call.1} parent=1 // pred_check
      _
    $region11: #{tpu_custom_call.1} parent=1 // pred_check_branch
      %440 = sbr.rel (0) target = $region13
    $region12: #{tpu_custom_call.1} parent=1 // pred_region
      %442 = vsyncadd [#allocation3], 0
      %s443 = sshll.u32 [#allocation2], 4
      %s444 = int_to_ptr.vmem [resolvable:$true] %s443
      %s445 = sshll.u32 %s2, 4
      %s446 = int_to_ptr.hbm [resolvable:$true] %s445
      %451 = dma.vmem_to_hbm [thread:$0]  %s444, 4096, %s446, [#allocation3], 128, 128, 8
    $region13: #{tpu_custom_call.1} parent=1 // pred_fallthru
      _
    // Predicated region
    $region14: #{tpu_custom_call.1} parent=1 // pred_check
      _
    $region15: #{tpu_custom_call.1} parent=1 // pred_check_branch
      %453 = sbr.rel (0) target = $region17
    $region16: #{tpu_custom_call.1} parent=1 // pred_region
      %455 = dma.done [#allocation3], 4096
    $region17: #{tpu_custom_call.1} parent=1 // pred_fallthru
      _
    %456 = vsyncpa [#allocation3], 1

</llo_original>
